<compile_context>
chip_gen: v7x
topology: tpu7x:2x2x1
jax: 0.10.0
libtpu: 0.0.40
codegen_flags: <defaults>
</compile_context>

<pallas_src>
import math
import numpy as np
import jax
import jax.numpy as jnp
from jax import lax
from jax.experimental import pallas as pl
from jax.experimental.pallas import tpu as pltpu


VMEM_BUDGET = 16 * 1024 * 1024   # per-step block budget (safe on v5e/v6e/v7x)
VMEM_LIMIT = 32 * 1024 * 1024    # scoped VMEM limit handed to the compiler


def _round_up(x, m):
    return ((x + m - 1) // m) * m


# --------------------------- kernel bodies --------------------------------- #

def _make_fused_kernel(inv_sqrt_dim, k_len, need_kmask):
    """Single-K-block kernel: full softmax per (batch-tile, q-tile) grid step.

    Block refs (batch-blocked, 3-D):
      q_ref: (Bt, tq, D)   k_ref/v_ref: (Bt, Lkp, D)   o_ref: (Bt, tq, D)
    """

    def kernel(q_ref, k_ref, v_ref, o_ref):
        q = q_ref[...]
        k = k_ref[...]
        v = v_ref[...]
        # fold 1/sqrt(dim) into the (smaller) q tile rather than the score tile
        qs = q * inv_sqrt_dim
        s = jnp.einsum('bqd,bkd->bqk', qs, k,
                       preferred_element_type=jnp.float32)       # (Bt, tq, Lkp)
        if need_kmask:
            col = lax.broadcasted_iota(jnp.int32, s.shape, 2)
            s = jnp.where(col < k_len, s, -jnp.inf)
        m = jnp.max(s, axis=-1, keepdims=True)
        p = jnp.exp(s - m)
        l = jnp.sum(p, axis=-1, keepdims=True)
        ctx = jnp.einsum('bqk,bkd->bqd', p.astype(v.dtype), v,
                         preferred_element_type=jnp.float32)     # (Bt, tq, D)
        # EUP approx reciprocal + one Newton step on the small (Bt, tq, 1) vec
        inv_l = pl.reciprocal(l, approx=True)
        inv_l = inv_l * (2.0 - l * inv_l)
        o_ref[...] = (ctx * inv_l).astype(o_ref.dtype)

    return kernel


def _make_flash_kernel(inv_sqrt_dim, k_len, tk, need_kmask):
    """Flash / online-softmax kernel, used only when K/V exceed the VMEM budget.

    Block refs (batch dim squeezed -> 2-D refs):
      q_ref: (tq, D)   k_ref/v_ref: (tk, D)   o_ref: (tq, D)
    Scratch: m_sc/l_sc (tq, 1) f32, acc_sc (tq, D) f32.
    Grid: (B, q_tiles, k_tiles); last axis is the sequential reduction.
    """

    def kernel(q_ref, k_ref, v_ref, o_ref, m_sc, l_sc, acc_sc):
        j = pl.program_id(2)

        @pl.when(j == 0)
        def _init():
            m_sc[...] = jnp.full_like(m_sc, -jnp.inf)
            l_sc[...] = jnp.zeros_like(l_sc)
            acc_sc[...] = jnp.zeros_like(acc_sc)

        q = q_ref[...]                       # (tq, D)
        k = k_ref[...]                       # (tk, D)
        v = v_ref[...]                       # (tk, D)
        qs = q * inv_sqrt_dim                # scale q tile, not the score tile

        s = lax.dot_general(qs, k, (((1,), (1,)), ((), ())),
                            preferred_element_type=jnp.float32)   # (tq, tk)
        if need_kmask:
            # only the last key block carries padding; mask those columns out
            col = lax.broadcasted_iota(jnp.int32, s.shape, 1) + j * tk
            s = jnp.where(col < k_len, s, -jnp.inf)

        m_prev = m_sc[...]                                        # (tq, 1)
        m_new = jnp.maximum(m_prev, jnp.max(s, axis=-1, keepdims=True))
        alpha = jnp.exp(m_prev - m_new)
        p = jnp.exp(s - m_new)                                    # (tq, tk) f32
        l_sc[...] = alpha * l_sc[...] + jnp.sum(p, axis=-1, keepdims=True)
        pv = lax.dot_general(p.astype(v.dtype), v, (((1,), (0,)), ((), ())),
                             preferred_element_type=jnp.float32)  # (tq, D)
        acc_sc[...] = alpha * acc_sc[...] + pv
        m_sc[...] = m_new

        @pl.when(j == pl.num_programs(2) - 1)
        def _finalize():
            l_val = l_sc[...]
            inv_l = pl.reciprocal(l_val, approx=True)
            inv_l = inv_l * (2.0 - l_val * inv_l)
            o_ref[...] = (acc_sc[...] * inv_l).astype(o_ref.dtype)

    return kernel


# ----------------------------- wrapper -------------------------------------- #

def _fast_footprint(Bt, tq, Lkp, D, itemsize):
    # double-buffered q/k/v/out blocks + f32 score/prob temporaries
    blocks = 2 * Bt * (2 * tq + 2 * Lkp) * D * itemsize
    temps = 2 * Bt * tq * Lkp * 4
    return blocks + temps


def _flash_footprint(tq, tk, D, itemsize):
    blocks = 2 * (2 * tq + 2 * tk) * D * itemsize   # double-buffered q/k/v/out
    scratch = tq * D * 4 + 2 * tq * 4               # acc + m/l
    temps = 2 * tq * tk * 4                         # s and p tiles
    return blocks + scratch + temps


def scaled_dot_product_attention(query, key, value, dim=None, *, _force_flash=False):
    """query: (B, Lq, D), key/value: (B, Lk, D) -> context: (B, Lq, D)."""
    B, Lq, D = query.shape
    Bk, Lk, Dk = key.shape
    assert Bk == B and Dk == D and value.shape == (B, Lk, D)
    if dim is None:
        dim = D
    inv_sqrt_dim = float(1.0 / math.sqrt(dim))
    itemsize = jnp.dtype(query.dtype).itemsize

    # Feature dim is never padded: a block dim equal to the full array dim is
    # exempt from the 128-lane divisibility rule.  Sequence dims pad to 8.
    Lq8 = _round_up(Lq, 8)
    Lk8 = _round_up(Lk, 8)

    def _pad_seq(x, Lp):
        if Lp == x.shape[1]:
            return x
        return jnp.pad(x, ((0, 0), (0, Lp - x.shape[1]), (0, 0)))

    tq_cap = min(Lq8, 512)
    use_fast = (not _force_flash) and (
        _fast_footprint(1, tq_cap, Lk8, D, itemsize) <= VMEM_BUDGET)

    if use_fast:
        # ---- single-K-block fast path: key-reduction axis collapses to 1 ----
        tq = tq_cap
        Lqp = _round_up(Lq, tq)
        Lkp = Lk8
        n_q_blocks = Lqp // tq

        # Batch blocking: amortize per-step overhead for tiny sequences, but
        # keep >= 2 parallel grid points for v7x's two TensorCores when possible.
        Bt = 1
        for d in range(B, 0, -1):
            if B % d != 0:
                continue
            if d * tq > 1024:
                continue
            if _fast_footprint(d, tq, Lkp, D, itemsize) > VMEM_BUDGET:
                continue
            if (B // d) * n_q_blocks < 2 and B * n_q_blocks >= 2:
                continue
            Bt = d
            break

        qp = _pad_seq(query, Lqp)
        kp = _pad_seq(key, Lkp)
        vp = _pad_seq(value, Lkp)

        kernel = _make_fused_kernel(inv_sqrt_dim, Lk, need_kmask=(Lkp != Lk))
        out = pl.pallas_call(
            kernel,
            out_shape=jax.ShapeDtypeStruct((B, Lqp, D), query.dtype),
            grid_spec=pltpu.PrefetchScalarGridSpec(
                num_scalar_prefetch=0,
                grid=(B // Bt, n_q_blocks),
                in_specs=[
                    pl.BlockSpec((Bt, tq, D), lambda b, i: (b, i, 0)),
                    pl.BlockSpec((Bt, Lkp, D), lambda b, i: (b, 0, 0)),
                    pl.BlockSpec((Bt, Lkp, D), lambda b, i: (b, 0, 0)),
                ],
                out_specs=pl.BlockSpec((Bt, tq, D), lambda b, i: (b, i, 0)),
            ),
            compiler_params=pltpu.CompilerParams(
                dimension_semantics=("parallel", "parallel"),
                vmem_limit_bytes=VMEM_LIMIT),
        )(qp, kp, vp)
    else:
        # ---- flash / online-softmax path for large K/V ----------------------
        tq = min(Lq8, 512)
        tk = min(Lk8, 512)
        while _flash_footprint(tq, tk, D, itemsize) > VMEM_BUDGET:
            if tk > 128 and tk >= tq:
                tk = max(128, _round_up(tk // 2, 8))
            elif tq > 128:
                tq = max(128, _round_up(tq // 2, 8))
            else:
                break
        Lqp = _round_up(Lq, tq)
        Lkp = _round_up(Lk, tk)

        qp = _pad_seq(query, Lqp)
        kp = _pad_seq(key, Lkp)
        vp = _pad_seq(value, Lkp)

        kernel = _make_flash_kernel(inv_sqrt_dim, Lk, tk, need_kmask=(Lkp != Lk))
        out = pl.pallas_call(
            kernel,
            out_shape=jax.ShapeDtypeStruct((B, Lqp, D), query.dtype),
            grid_spec=pltpu.PrefetchScalarGridSpec(
                num_scalar_prefetch=0,
                grid=(B, Lqp // tq, Lkp // tk),
                in_specs=[
                    pl.BlockSpec((None, tq, D), lambda b, i, j: (b, i, 0)),
                    pl.BlockSpec((None, tk, D), lambda b, i, j: (b, j, 0)),
                    pl.BlockSpec((None, tk, D), lambda b, i, j: (b, j, 0)),
                ],
                out_specs=pl.BlockSpec((None, tq, D), lambda b, i, j: (b, i, 0)),
                scratch_shapes=[
                    pltpu.VMEM((tq, 1), jnp.float32),   # running max
                    pltpu.VMEM((tq, 1), jnp.float32),   # running denom
                    pltpu.VMEM((tq, D), jnp.float32),   # running context acc
                ]),
            compiler_params=pltpu.CompilerParams(
                dimension_semantics=("parallel", "parallel", "arbitrary"),
                vmem_limit_bytes=VMEM_LIMIT),
        )(qp, kp, vp)

    if Lqp != Lq:
        out = out[:, :Lq, :]
    return out


class ScaledDotProductAttentionPallas:
    """Drop-in JAX/Pallas equivalent of the PyTorch ScaledDotProductAttention.

    forward(query, key, value) returns only the context tensor, matching the
    original module's forward.
    """

    def __init__(self, dim):
        self.dim = dim

    def __call__(self, query, key, value):
        return scaled_dot_product_attention(query, key, value, dim=self.dim)


# ------------------------------ reference ---------------------------------- #

def _ref_sdpa(query, key, value, dim):
    score = jnp.einsum('bqd,bkd->bqk', query.astype(jnp.float32),
                       key.astype(jnp.float32),
                       precision=lax.Precision.HIGHEST) / math.sqrt(dim)
    attn = jax.nn.softmax(score, axis=-1)
    ctx = jnp.einsum('bqk,bkd->bqd', attn, value.astype(jnp.float32),
                     precision=lax.Precision.HIGHEST)
    return ctx.astype(query.dtype)


def _check(B, Lq, Lk, D, seed, force_flash=False):
    key0 = jax.random.fold_in(jax.random.PRNGKey(0), seed)
    k1, k2, k3 = jax.random.split(key0, 3)
    q = jax.random.normal(k1, (B, Lq, D), jnp.float32)
    k = jax.random.normal(k2, (B, Lk, D), jnp.float32)
    v = jax.random.normal(k3, (B, Lk, D), jnp.float32)
    out = scaled_dot_product_attention(q, k, v, dim=D, _force_flash=force_flash)
    out = jax.block_until_ready(out)
    assert out.shape == (B, Lq, D)
    # Tolerance accounts for the MXU's default f32 matmul precision inside the
    # kernel vs. the HIGHEST-precision XLA reference.
    np.testing.assert_allclose(np.asarray(out),
                               np.asarray(_ref_sdpa(q, k, v, D)),
                               rtol=2e-2, atol=2e-2)
    return out


if __name__ == "__main__":
    # small shapes implied by the module (batch=2, q_len=k_len=8, d_model=32)
    _check(B=2, Lq=8, Lk=8, D=32, seed=0)
    # non-aligned shapes: exercises sequence padding + key-mask path
    _check(B=2, Lq=10, Lk=12, D=20, seed=1)
    # moderate shapes: still single-K-block fast path (reduction collapsed)
    _check(B=2, Lq=256, Lk=384, D=64, seed=2)
    # force the flash / online-softmax path (multi-step reduction + key mask)
    _check(B=2, Lq=128, Lk=1000, D=64, seed=3, force_flash=True)
    print("KERNEL_OK")
</pallas_src>

<mosaic_0001>
module attributes {stable_mosaic.version = 11 : i64} {
  func.func @kernel(%arg0: i32, %arg1: i32, %arg2: memref<1x8x32xf32, #tpu.memory_space<vmem>>, %arg3: memref<1x8x32xf32, #tpu.memory_space<vmem>>, %arg4: memref<1x8x32xf32, #tpu.memory_space<vmem>>, %arg5: memref<1x8x32xf32, #tpu.memory_space<vmem>>) attributes {dimension_semantics = [#tpu.dimension_semantics<parallel>, #tpu.dimension_semantics<parallel>], iteration_bounds = array<i64: 2, 1>, scalar_prefetch = 0 : i64, scratch_operands = 0 : i64, tpu.core_type = #tpu.core_type<tc>, window_params = [{transform_indices = @transform_0, window_bounds = array<i64: 1, 8, 32>}, {transform_indices = @transform_1, window_bounds = array<i64: 1, 8, 32>}, {transform_indices = @transform_2, window_bounds = array<i64: 1, 8, 32>}, {transform_indices = @transform_3, window_bounds = array<i64: 1, 8, 32>}]} {
    %c0 = arith.constant 0 : index
    %c0_0 = arith.constant 0 : index
    %c0_1 = arith.constant 0 : index
    %0 = vector.load %arg2[%c0, %c0_0, %c0_1] : memref<1x8x32xf32, #tpu.memory_space<vmem>>, vector<1x8x32xf32>
    %c0_2 = arith.constant 0 : index
    %c0_3 = arith.constant 0 : index
    %c0_4 = arith.constant 0 : index
    %1 = vector.load %arg3[%c0_2, %c0_3, %c0_4] : memref<1x8x32xf32, #tpu.memory_space<vmem>>, vector<1x8x32xf32>
    %c0_5 = arith.constant 0 : index
    %c0_6 = arith.constant 0 : index
    %c0_7 = arith.constant 0 : index
    %2 = vector.load %arg4[%c0_5, %c0_6, %c0_7] : memref<1x8x32xf32, #tpu.memory_space<vmem>>, vector<1x8x32xf32>
    %cst = arith.constant 0.176776692 : f32
    %3 = vector.broadcast %cst : f32 to vector<1x8x32xf32>
    %4 = arith.mulf %0, %3 : vector<1x8x32xf32>
    "tpu.trace_start"() <{level = 10 : i32, message = "bqd,bkd->bqk"}> : () -> ()
    %cst_8 = arith.constant dense<0.000000e+00> : vector<1x8x8xf32>
    %5 = tpu.matmul %4, %1, %cst_8 {dimension_numbers = #tpu.dot_dimension_numbers<[2], [2], [1], [1], [0, 0, 0, 1, 1, 1], [0], [0]>} : vector<1x8x32xf32>, vector<1x8x32xf32>, vector<1x8x8xf32> -> vector<1x8x8xf32>
    "tpu.trace_stop"() : () -> ()
    %cst_9 = arith.constant dense<0xFF800000> : vector<1x8xf32>
    %6 = vector.multi_reduction <maximumf>, %5, %cst_9 [2] : vector<1x8x8xf32> to vector<1x8xf32>
    %7 = vector.shape_cast %6 : vector<1x8xf32> to vector<1x8x1xf32>
    %8 = vector.broadcast %7 : vector<1x8x1xf32> to vector<1x8x8xf32>
    %9 = arith.subf %5, %8 : vector<1x8x8xf32>
    %10 = math.exp %9 : vector<1x8x8xf32>
    %cst_10 = arith.constant dense<0.000000e+00> : vector<1x8xf32>
    %11 = vector.multi_reduction <add>, %10, %cst_10 [2] : vector<1x8x8xf32> to vector<1x8xf32>
    %12 = vector.shape_cast %11 : vector<1x8xf32> to vector<1x8x1xf32>
    "tpu.trace_start"() <{level = 10 : i32, message = "bqk,bkd->bqd"}> : () -> ()
    %cst_11 = arith.constant dense<0.000000e+00> : vector<1x8x32xf32>
    %13 = tpu.matmul %10, %2, %cst_11 {dimension_numbers = #tpu.dot_dimension_numbers<[2], [1], [1], [2], [0, 0, 0, 1, 1, 2], [0], [0]>} : vector<1x8x8xf32>, vector<1x8x32xf32>, vector<1x8x32xf32> -> vector<1x8x32xf32>
    "tpu.trace_stop"() : () -> ()
    %14 = tpu.reciprocal %12 {approx = true} : vector<1x8x1xf32> -> vector<1x8x1xf32>
    %15 = arith.mulf %12, %14 : vector<1x8x1xf32>
    %cst_12 = arith.constant 2.000000e+00 : f32
    %16 = vector.broadcast %cst_12 : f32 to vector<1x8x1xf32>
    %17 = arith.subf %16, %15 : vector<1x8x1xf32>
    %18 = arith.mulf %14, %17 : vector<1x8x1xf32>
    %19 = vector.broadcast %18 : vector<1x8x1xf32> to vector<1x8x32xf32>
    %20 = arith.mulf %13, %19 : vector<1x8x32xf32>
    %c0_13 = arith.constant 0 : index
    %c0_14 = arith.constant 0 : index
    %c0_15 = arith.constant 0 : index
    %21 = vector.load %arg5[%c0_13, %c0_14, %c0_15] : memref<1x8x32xf32, #tpu.memory_space<vmem>>, vector<1x8x32xf32>
    tpu.vector_store %arg5[%c0_13, %c0_14, %c0_15], %20 {strides = array<i32>} : memref<1x8x32xf32, #tpu.memory_space<vmem>>, vector<1x8x32xf32>,
    return
  }
  func.func @transform_0(%arg0: i32, %arg1: i32) -> (i32, i32, i32) {
    %c0_i32 = arith.constant 0 : i32
    %c0_i32_0 = arith.constant 0 : i32
    return %arg0, %arg1, %c0_i32 : i32, i32, i32
  }
  func.func @transform_1(%arg0: i32, %arg1: i32) -> (i32, i32, i32) {
    %c0_i32 = arith.constant 0 : i32
    %c0_i32_0 = arith.constant 0 : i32
    %c0_i32_1 = arith.constant 0 : i32
    return %arg0, %c0_i32, %c0_i32_0 : i32, i32, i32
  }
  func.func @transform_2(%arg0: i32, %arg1: i32) -> (i32, i32, i32) {
    %c0_i32 = arith.constant 0 : i32
    %c0_i32_0 = arith.constant 0 : i32
    %c0_i32_1 = arith.constant 0 : i32
    return %arg0, %c0_i32, %c0_i32_0 : i32, i32, i32
  }
  func.func @transform_3(%arg0: i32, %arg1: i32) -> (i32, i32, i32) {
    %c0_i32 = arith.constant 0 : i32
    %c0_i32_0 = arith.constant 0 : i32
    return %arg0, %arg1, %c0_i32 : i32, i32, i32
  }
}

</mosaic_0001>

<llo_original>
// kernel: tpu_custom_call.1
$region0: #{tpu_custom_call.1}
  #allocation0 [shape = 'u32[]', space=smem, size = 0x4, offset = 0x4, fixed_abs, tag = 'smem constant byte address 0x4 - core index']
  #allocation1 [shape = 'u32[144,128]{1,0:T(1,128)}', space=vmem, size = 0x12000, scoped, tag = 'internal scratch']
  %s0 = inlined_call_operand.hbm [shape: f32[2,8,32], index: 0, kind: input, shape index: {}]
  %s1 = inlined_call_operand.hbm [shape: f32[2,8,32], index: 1, kind: input, shape index: {}]
  %s2 = inlined_call_operand.hbm [shape: f32[2,8,32], index: 2, kind: input, shape index: {}]
  %s3 = inlined_call_operand.hbm [shape: f32[2,8,32], index: 3, kind: output, shape index: {}]
  %s4 = sld [smem:[#allocation0]]
  $region57: #{tpu_custom_call.1} parent=0
    _
  %s6 = ssub.s32 1, %s4
  %s7 = scalar_select 0, %s6, %s4
  $region1: #{tpu_custom_call.1} parent=0
    #allocation2 [shape = 'u8[8192]{0}', space=vmem, size = 0x2000, scoped, tag = 'input window, operand 0']
    #allocation3 [shape = 's32[2]{0}', space=sflag, size = 0x8, scoped, tag = 'scoped memory for tpu_custom_call.1']
    #allocation4 [shape = 's32[2]{0}', space=sflag, size = 0x8, scoped, tag = 'scoped memory for tpu_custom_call.1']
    #allocation5 [shape = 'u8[8192]{0}', space=vmem, size = 0x2000, scoped, tag = 'input window, operand 1']
    #allocation6 [shape = 's32[2]{0}', space=sflag, size = 0x8, scoped, tag = 'scoped memory for tpu_custom_call.1']
    #allocation7 [shape = 'u8[8192]{0}', space=vmem, size = 0x2000, scoped, tag = 'input window, operand 2']
    #allocation8 [shape = 'u8[8192]{0}', space=vmem, size = 0x2000, scoped, tag = 'output window, operand 0']
    %8 = vsyncpa [#allocation3], 0
    %s9 = scalar_lea.sflag [#allocation3], 1
    %10 = vsyncpa %s9, 0
    %11 = vsyncpa [#allocation6], 0
    %s12 = scalar_lea.sflag [#allocation6], 1
    %13 = vsyncpa %s12, 0
    %14 = vsyncpa [#allocation4], 0
    %s15 = scalar_lea.sflag [#allocation4], 1
    %16 = vsyncpa %s15, 0
    loop: start=0, step=1, limit=4
    $region2: #{tpu_custom_call.1} parent=1 // loop_pre_header
      _
    $region3: #{tpu_custom_call.1} parent=1 // loop_header
      %s18 = sphi 0, %s22
      %p19 = scmp.ge.s32.totalorder %s18, 4
      %s25 = sphi 0, %s37
      %s26 = sphi 0, %s33
      %s27 = sphi 0, %s25
      %s28 = sphi 0, %s26
      %s29 = sphi 0, %s27
      %s30 = sphi 0, %s28
      %s42 = sphi 0, %s44
      %s45 = sphi 0, %s42
      %s46 = sphi 0, %s45
      %s62 = sphi 0, %s46
      %s68 = sphi 0, %s70
      %s71 = sphi 0, %s68
      %s72 = sphi 0, %s71
      %s88 = sphi 0, %s72
      %s94 = sphi 0, %s96
      %s97 = sphi 0, %s94
      %s98 = sphi 0, %s97
      %s114 = sphi 0, %s98
      %s122 = sphi 0, %s124
      %s125 = sphi 0, %s122
      %s126 = sphi 0, %s125
      %s142 = sphi 0, %s126
    $region4: #{tpu_custom_call.1} parent=1 // loop_header_branch
      %21 = sbr.rel (%p19) target = $region8
    $region5: #{tpu_custom_call.1} parent=1 // loop_body
      %s23 = ssub.s32 %s18, 1
      %s24 = ssub.s32 %s18, 2
      %s31 = sadd.s32 1, %s26
      %p32 = scmp.ge.s32.totalorder %s31, 1
      %s33 = scalar_select %p32, 0, %s31
      %s34 = sadd.s32 1, %s25
      %s35 = scalar_select %p32, %s34, %s25
      %p36 = scmp.ge.s32.totalorder %s35, 2
      %s37 = scalar_select %p36, 0, %s35
      %s38 = ssub.s32 %s25, %s37
      %s39 = ssub.s32 %s26, %s33
      %s40 = sor.u32 %s38, %s39
      %p41 = scmp.eq.s32.totalorder %s40, 0
      %s43 = sadd.s32 %s42, 1
      %s44 = scalar_select %p41, %s42, %s43
      %p47 = pneg %p41
      %p48 = scmp.eq.s32.totalorder %s18, 1
      %p49 = por %p47, %p48
      %p50 = scmp.ne.s32.totalorder %s42, %s45
      %p51 = scmp.eq.s32.totalorder %s18, 0
      %p52 = por %p50, %p51
      %p53 = scmp.ne.s32.totalorder %s42, %s45
      %p54 = scmp.eq.s32.totalorder %s23, 1
      %p55 = por %p53, %p54
      %p56 = scmp.ne.s32.totalorder %s45, %s46
      %p57 = scmp.eq.s32.totalorder %s23, 0
      %p58 = por %p56, %p57
      %p59 = scmp.ne.s32.totalorder %s45, %s46
      %p60 = scmp.eq.s32.totalorder %s24, 1
      %p61 = por %p59, %p60
      %p63 = scmp.ne.s32.totalorder %s46, %s62
      %p64 = scmp.eq.s32.totalorder %s24, 0
      %p65 = por %p63, %p64
      %s66 = ssub.s32 %s25, %s37
      %p67 = scmp.eq.s32.totalorder %s66, 0
      %s69 = sadd.s32 %s68, 1
      %s70 = scalar_select %p67, %s68, %s69
      %p73 = pneg %p67
      %p74 = scmp.eq.s32.totalorder %s18, 1
      %p75 = por %p73, %p74
      %p76 = scmp.ne.s32.totalorder %s68, %s71
      %p77 = scmp.eq.s32.totalorder %s18, 0
      %p78 = por %p76, %p77
      %p79 = scmp.ne.s32.totalorder %s68, %s71
      %p80 = scmp.eq.s32.totalorder %s23, 1
      %p81 = por %p79, %p80
      %p82 = scmp.ne.s32.totalorder %s71, %s72
      %p83 = scmp.eq.s32.totalorder %s23, 0
      %p84 = por %p82, %p83
      %p85 = scmp.ne.s32.totalorder %s71, %s72
      %p86 = scmp.eq.s32.totalorder %s24, 1
      %p87 = por %p85, %p86
      %p89 = scmp.ne.s32.totalorder %s72, %s88
      %p90 = scmp.eq.s32.totalorder %s24, 0
      %p91 = por %p89, %p90
      %s92 = ssub.s32 %s25, %s37
      %p93 = scmp.eq.s32.totalorder %s92, 0
      %s95 = sadd.s32 %s94, 1
      %s96 = scalar_select %p93, %s94, %s95
      %p99 = pneg %p93
      %p100 = scmp.eq.s32.totalorder %s18, 1
      %p101 = por %p99, %p100
      %p102 = scmp.ne.s32.totalorder %s94, %s97
      %p103 = scmp.eq.s32.totalorder %s18, 0
      %p104 = por %p102, %p103
      %p105 = scmp.ne.s32.totalorder %s94, %s97
      %p106 = scmp.eq.s32.totalorder %s23, 1
      %p107 = por %p105, %p106
      %p108 = scmp.ne.s32.totalorder %s97, %s98
      %p109 = scmp.eq.s32.totalorder %s23, 0
      %p110 = por %p108, %p109
      %p111 = scmp.ne.s32.totalorder %s97, %s98
      %p112 = scmp.eq.s32.totalorder %s24, 1
      %p113 = por %p111, %p112
      %p115 = scmp.ne.s32.totalorder %s98, %s114
      %p116 = scmp.eq.s32.totalorder %s24, 0
      %p117 = por %p115, %p116
      %s118 = ssub.s32 %s25, %s37
      %s119 = ssub.s32 %s26, %s33
      %s120 = sor.u32 %s118, %s119
      %p121 = scmp.eq.s32.totalorder %s120, 0
      %s123 = sadd.s32 %s122, 1
      %s124 = scalar_select %p121, %s122, %s123
      %p127 = pneg %p121
      %p128 = scmp.eq.s32.totalorder %s18, 1
      %p129 = por %p127, %p128
      %p130 = scmp.ne.s32.totalorder %s122, %s125
      %p131 = scmp.eq.s32.totalorder %s18, 0
      %p132 = por %p130, %p131
      %p133 = scmp.ne.s32.totalorder %s122, %s125
      %p134 = scmp.eq.s32.totalorder %s23, 1
      %p135 = por %p133, %p134
      %p136 = scmp.ne.s32.totalorder %s125, %s126
      %p137 = scmp.eq.s32.totalorder %s23, 0
      %p138 = por %p136, %p137
      %p139 = scmp.ne.s32.totalorder %s125, %s126
      %p140 = scmp.eq.s32.totalorder %s24, 1
      %p141 = por %p139, %p140
      %p143 = scmp.ne.s32.totalorder %s126, %s142
      %p144 = scmp.eq.s32.totalorder %s24, 0
      %p145 = por %p143, %p144
      %p146 = scmp.le.s32.totalorder 1, %s18
      %p147 = scmp.lt.s32.totalorder %s18, 3
      %p148 = pnand %p146, %p147
      %p149 = pneg %p148
      // Predicated region
      $region9: #{tpu_custom_call.1} parent=5 // pred_check
        _
      $region10: #{tpu_custom_call.1} parent=5 // pred_check_branch
        %151 = sbr.rel (%p148) target = $region12
      $region11: #{tpu_custom_call.1} parent=5 // pred_region
        %s152 = ssub.s32 %s18, 1
      $region12: #{tpu_custom_call.1} parent=5 // pred_fallthru
        _
      %p153 = scmp.lt.s32.totalorder %s18, 2
      // Predicated region
      $region13: #{tpu_custom_call.1} parent=5 // pred_check
        %p154 = pneg %p153
      $region14: #{tpu_custom_call.1} parent=5 // pred_check_branch
        %156 = sbr.rel (%p154) target = $region16
      $region15: #{tpu_custom_call.1} parent=5 // pred_region
        // Predicated region
        $region17: #{tpu_custom_call.1} parent=15 // pred_check
          %p157 = pneg %p52
        $region18: #{tpu_custom_call.1} parent=15 // pred_check_branch
          %159 = sbr.rel (%p157) target = $region20
        $region19: #{tpu_custom_call.1} parent=15 // pred_region
          %s160 = sand.u32 %s42, 1
          %s161 = scalar_lea.sflag [#allocation3], %s160
          %s162 = sand.u32 %s42, 1
          %s163 = smul.addr %s162, 8
          %s164 = scalar_lea.vmem [#allocation2], %s163
          %s166 = ssub.s32 128, 128
          %167 = vsyncadd %s161, %s166
          %s168 = sadd.s32 %s26, %s25
          %s169 = smul.addr %s168, 128
          %s170 = scalar_lea.hbm %s0, %s169
          %s172 = sshll.u32 %s164, 4
          %s173 = int_to_ptr.vmem [resolvable:$true] %s172
          %175 = dma.hbm_to_vmem [thread:$0]  %s170, 128, %s173, %s161
        $region20: #{tpu_custom_call.1} parent=15 // pred_fallthru
          _
        // Predicated region
        $region21: #{tpu_custom_call.1} parent=15 // pred_check
          %p176 = pneg %p78
        $region22: #{tpu_custom_call.1} parent=15 // pred_check_branch
          %178 = sbr.rel (%p176) target = $region24
        $region23: #{tpu_custom_call.1} parent=15 // pred_region
          %s179 = sand.u32 %s18, 1
          %s180 = scalar_lea.sflag [#allocation6], %s179
          %s181 = sand.u32 %s68, 1
          %s182 = smul.addr %s181, 8
          %s183 = scalar_lea.vmem [#allocation5], %s182
          %s185 = ssub.s32 128, 128
          %186 = vsyncadd %s180, %s185
          %s187 = smul.addr %s25, 128
          %s188 = scalar_lea.hbm %s1, %s187
          %s190 = sshll.u32 %s183, 4
          %s191 = int_to_ptr.vmem [resolvable:$true] %s190
          %193 = dma.hbm_to_vmem [thread:$0]  %s188, 128, %s191, %s180
        $region24: #{tpu_custom_call.1} parent=15 // pred_fallthru
          _
        // Predicated region
        $region25: #{tpu_custom_call.1} parent=15 // pred_check
          %p194 = pneg %p104
        $region26: #{tpu_custom_call.1} parent=15 // pred_check_branch
          %196 = sbr.rel (%p194) target = $region28
        $region27: #{tpu_custom_call.1} parent=15 // pred_region
          %s197 = sand.u32 %s18, 1
          %s198 = scalar_lea.sflag [#allocation6], %s197
          %s199 = sand.u32 %s94, 1
          %s200 = smul.addr %s199, 8
          %s201 = scalar_lea.vmem [#allocation7], %s200
          %s203 = ssub.s32 128, 128
          %204 = vsyncadd %s198, %s203
          %s205 = smul.addr %s25, 128
          %s206 = scalar_lea.hbm %s2, %s205
          %s208 = sshll.u32 %s201, 4
          %s209 = int_to_ptr.vmem [resolvable:$true] %s208
          %211 = dma.hbm_to_vmem [thread:$0]  %s206, 128, %s209, %s198
        $region28: #{tpu_custom_call.1} parent=15 // pred_fallthru
          _
      $region16: #{tpu_custom_call.1} parent=5 // pred_fallthru
        _
      %p212 = scmp.le.s32.totalorder 1, %s18
      %p213 = scmp.lt.s32.totalorder %s18, 3
      %p214 = pnand %p212, %p213
      %p215 = pneg %p214
      // Predicated region
      $region29: #{tpu_custom_call.1} parent=5 // pred_check
        _
      $region30: #{tpu_custom_call.1} parent=5 // pred_check_branch
        %217 = sbr.rel (%p214) target = $region32
      $region31: #{tpu_custom_call.1} parent=5 // pred_region
        %s218 = ssub.s32 %s18, 1
        %s219 = sand.u32 %s45, 1
        %s220 = scalar_lea.sflag [#allocation3], %s219
        %s221 = sand.u32 %s45, 1
        %s222 = smul.addr %s221, 8
        %s223 = scalar_lea.vmem [#allocation2], %s222
        // Predicated region
        $region33: #{tpu_custom_call.1} parent=31 // pred_check
          %p224 = pneg %p58
        $region34: #{tpu_custom_call.1} parent=31 // pred_check_branch
          %226 = sbr.rel (%p224) target = $region36
        $region35: #{tpu_custom_call.1} parent=31 // pred_region
          %227 = dma.done %s220, 128
        $region36: #{tpu_custom_call.1} parent=31 // pred_fallthru
          _
        %s228 = sand.u32 %s23, 1
        %s229 = scalar_lea.sflag [#allocation6], %s228
        %s230 = sand.u32 %s71, 1
        %s231 = smul.addr %s230, 8
        %s232 = scalar_lea.vmem [#allocation5], %s231
        // Predicated region
        $region37: #{tpu_custom_call.1} parent=31 // pred_check
          %p233 = pneg %p84
        $region38: #{tpu_custom_call.1} parent=31 // pred_check_branch
          %235 = sbr.rel (%p233) target = $region40
        $region39: #{tpu_custom_call.1} parent=31 // pred_region
          %236 = dma.done %s229, 128
        $region40: #{tpu_custom_call.1} parent=31 // pred_fallthru
          _
        %s237 = sand.u32 %s23, 1
        %s238 = scalar_lea.sflag [#allocation6], %s237
        %s239 = sand.u32 %s97, 1
        %s240 = smul.addr %s239, 8
        %s241 = scalar_lea.vmem [#allocation7], %s240
        // Predicated region
        $region41: #{tpu_custom_call.1} parent=31 // pred_check
          %p242 = pneg %p110
        $region42: #{tpu_custom_call.1} parent=31 // pred_check_branch
          %244 = sbr.rel (%p242) target = $region44
        $region43: #{tpu_custom_call.1} parent=31 // pred_region
          %245 = dma.done %s238, 128
        $region44: #{tpu_custom_call.1} parent=31 // pred_fallthru
          _
        %s246 = sand.u32 %s45, 1
        %s247 = scalar_lea.sflag [#allocation3], %s246
        %s248 = sand.u32 %s45, 1
        %s249 = smul.addr %s248, 8
        %s250 = scalar_lea.vmem [#allocation2], %s249
        %p251 = pneg %p58
        %p252 = pneg %p55
        %s253 = sand.u32 %s23, 1
        %s254 = scalar_lea.sflag [#allocation6], %s253
        %s255 = sand.u32 %s71, 1
        %s256 = smul.addr %s255, 8
        %s257 = scalar_lea.vmem [#allocation5], %s256
        %p258 = pneg %p84
        %p259 = pneg %p81
        %s260 = sand.u32 %s23, 1
        %s261 = scalar_lea.sflag [#allocation6], %s260
        %s262 = sand.u32 %s97, 1
        %s263 = smul.addr %s262, 8
        %s264 = scalar_lea.vmem [#allocation7], %s263
        %p265 = pneg %p110
        %p266 = pneg %p107
        %p267 = pneg %p138
        %p268 = pneg %p135
        %s269 = sand.u32 %s125, 1
        %s270 = scalar_lea.sflag [#allocation4], %s269
        %s271 = sand.u32 %s125, 1
        %s272 = smul.addr %s271, 8
        %s273 = scalar_lea.vmem [#allocation8], %s272
        %v274 = vld [vmem:[%s223] sm:$0xff]
        %v275 = vld [vmem:[%s232] sm:$0xff]
        %v276 = vld [vmem:[%s241] sm:$0xff]
        %v277 = vmul.f32 %v274, 0.17677669
        %vm278 = vcmask 261120
        %v280 = vsel %vm278, %v277, 0
        %v283 = vsel %vm278, %v275, 0
        %285 = vmatprep.subr.mxu0 0.0
        %286 = vmatpush1.xpose.msra.mxu0 %v283
        %287 = vmatprep.subr.mxu0 0.0
        %288 = vmatpush1.xpose.msra.mxu0 0.0
        %289 = vmatprep.subr.mxu0 0.0
        %290 = vmatpush1.xpose.msra.mxu0 0.0
        %291 = vmatprep.subr.mxu0 0.0
        %292 = vmatpush1.xpose.msra.mxu0 0.0
        %293 = vmatprep.subr.mxu0 0.0
        %294 = vmatpush1.xpose.msra.mxu0 0.0
        %295 = vmatprep.subr.mxu0 0.0
        %296 = vmatpush1.xpose.msra.mxu0 0.0
        %297 = vmatprep.subr.mxu0 0.0
        %298 = vmatpush1.xpose.msra.mxu0 0.0
        %299 = vmatprep.subr.mxu0 0.0
        %300 = vmatpush1.xpose.msra.mxu0 0.0
        %301 = vmatprep.subr.mxu0 0.0
        %302 = vmatpush1.xpose.msra.mxu0 0.0
        %303 = vmatprep.subr.mxu0 0.0
        %304 = vmatpush1.xpose.msra.mxu0 0.0
        %305 = vmatprep.subr.mxu0 0.0
        %306 = vmatpush1.xpose.msra.mxu0 0.0
        %307 = vmatprep.subr.mxu0 0.0
        %308 = vmatpush1.xpose.msra.mxu0 0.0
        %309 = vmatprep.subr.mxu0 0.0
        %310 = vmatpush1.xpose.msra.mxu0 0.0
        %311 = vmatprep.subr.mxu0 0.0
        %312 = vmatpush1.xpose.msra.mxu0 0.0
        %313 = vmatprep.subr.mxu0 0.0
        %314 = vmatpush1.xpose.msra.mxu0 0.0
        %315 = vmatprep.subr.mxu0 0.0
        %316 = vmatpush1.xpose.msra.mxu0 0.0
        %317 = vmatprep.subr.mxu0 0.0
        %318 = vmatpush1.xpose.msra.mxu0 0.0
        %319 = vmatprep.subr.mxu0 0.0
        %320 = vmatpush1.xpose.msra.mxu0 0.0
        %321 = vmatprep.subr.mxu0 0.0
        %322 = vmatpush1.xpose.msra.mxu0 0.0
        %323 = vmatprep.subr.mxu0 0.0
        %324 = vmatpush1.xpose.msra.mxu0 0.0
        %325 = vmatprep.subr.mxu0 0.0
        %326 = vmatpush1.xpose.msra.mxu0 0.0
        %327 = vmatprep.subr.mxu0 0.0
        %328 = vmatpush1.xpose.msra.mxu0 0.0
        %329 = vmatprep.subr.mxu0 0.0
        %330 = vmatpush1.xpose.msra.mxu0 0.0
        %331 = vmatprep.subr.mxu0 0.0
        %332 = vmatpush1.xpose.msra.mxu0 0.0
        %333 = vmatprep.subr.mxu0 0.0
        %334 = vmatpush1.xpose.msra.mxu0 0.0
        %335 = vmatprep.subr.mxu0 0.0
        %336 = vmatpush1.xpose.msra.mxu0 0.0
        %337 = vmatprep.subr.mxu0 0.0
        %338 = vmatpush1.xpose.msra.mxu0 0.0
        %339 = vmatprep.subr.mxu0 0.0
        %340 = vmatpush1.xpose.msra.mxu0 0.0
        %341 = vmatprep.subr.mxu0 0.0
        %342 = vmatpush1.xpose.msra.mxu0 0.0
        %343 = vmatprep.subr.mxu0 0.0
        %344 = vmatpush1.xpose.msra.mxu0 0.0
        %345 = vmatprep.subr.mxu0 0.0
        %346 = vmatpush1.xpose.msra.mxu0 0.0
        %347 = vmatprep.subr.mxu0 0.0
        %348 = vmatpush1.xpose.msra.mxu0 0.0
        %349 = vmatprep.mubr.f32.mxu0 0.0
        %350 = vmatmul.mubr.f32.gmra.mrb[0].mxu0 %v280
        %v351 = vpop.f32.mrb[0].mxu0
        %v352 = vadd.f32 0.0, %v351
        %v353 = vpop.f32.mrb[0].mxu0
        %354 = vdwg.mxu0
        %vm355 = vcmask 64512
        %v356 = vsel %vm355, %v352, -inf
        %357 = vmax.xlane.f32.xlu0 %v356
        %v358 = vpop.xlane.xlu0 %357
        %v359 = vsub.f32 %v352, %v358
        %v360 = vmul.f32 %v359, 1.442695
        %v361 = vpow.pop %v360
        %v362 = vsel %vm355, %v361, 0.0
        %363 = vadd.xlane.f32.xlu0 %v362
        %v364 = vpop.xlane.xlu0 %363
        %v366 = vsel %vm355, %v361, 0
        %368 = vmatprep.subr.mxu0 0.0
        %369 = vmatpush1.msra.mxu0 %v276
        %370 = vmatprep.subr.mxu0 0.0
        %371 = vmatpush1.msra.mxu0 0.0
        %372 = vmatprep.subr.mxu0 0.0
        %373 = vmatpush1.msra.mxu0 0.0
        %374 = vmatprep.subr.mxu0 0.0
        %375 = vmatpush1.msra.mxu0 0.0
        %376 = vmatprep.subr.mxu0 0.0
        %377 = vmatpush1.msra.mxu0 0.0
        %378 = vmatprep.subr.mxu0 0.0
        %379 = vmatpush1.msra.mxu0 0.0
        %380 = vmatprep.subr.mxu0 0.0
        %381 = vmatpush1.msra.mxu0 0.0
        %382 = vmatprep.subr.mxu0 0.0
        %383 = vmatpush1.msra.mxu0 0.0
        %384 = vmatprep.subr.mxu0 0.0
        %385 = vmatpush1.msra.mxu0 0.0
        %386 = vmatprep.subr.mxu0 0.0
        %387 = vmatpush1.msra.mxu0 0.0
        %388 = vmatprep.subr.mxu0 0.0
        %389 = vmatpush1.msra.mxu0 0.0
        %390 = vmatprep.subr.mxu0 0.0
        %391 = vmatpush1.msra.mxu0 0.0
        %392 = vmatprep.subr.mxu0 0.0
        %393 = vmatpush1.msra.mxu0 0.0
        %394 = vmatprep.subr.mxu0 0.0
        %395 = vmatpush1.msra.mxu0 0.0
        %396 = vmatprep.subr.mxu0 0.0
        %397 = vmatpush1.msra.mxu0 0.0
        %398 = vmatprep.subr.mxu0 0.0
        %399 = vmatpush1.msra.mxu0 0.0
        %400 = vmatprep.subr.mxu0 0.0
        %401 = vmatpush1.msra.mxu0 0.0
        %402 = vmatprep.subr.mxu0 0.0
        %403 = vmatpush1.msra.mxu0 0.0
        %404 = vmatprep.subr.mxu0 0.0
        %405 = vmatpush1.msra.mxu0 0.0
        %406 = vmatprep.subr.mxu0 0.0
        %407 = vmatpush1.msra.mxu0 0.0
        %408 = vmatprep.subr.mxu0 0.0
        %409 = vmatpush1.msra.mxu0 0.0
        %410 = vmatprep.subr.mxu0 0.0
        %411 = vmatpush1.msra.mxu0 0.0
        %412 = vmatprep.subr.mxu0 0.0
        %413 = vmatpush1.msra.mxu0 0.0
        %414 = vmatprep.subr.mxu0 0.0
        %415 = vmatpush1.msra.mxu0 0.0
        %416 = vmatprep.subr.mxu0 0.0
        %417 = vmatpush1.msra.mxu0 0.0
        %418 = vmatprep.subr.mxu0 0.0
        %419 = vmatpush1.msra.mxu0 0.0
        %420 = vmatprep.subr.mxu0 0.0
        %421 = vmatpush1.msra.mxu0 0.0
        %422 = vmatprep.subr.mxu0 0.0
        %423 = vmatpush1.msra.mxu0 0.0
        %424 = vmatprep.subr.mxu0 0.0
        %425 = vmatpush1.msra.mxu0 0.0
        %426 = vmatprep.subr.mxu0 0.0
        %427 = vmatpush1.msra.mxu0 0.0
        %428 = vmatprep.subr.mxu0 0.0
        %429 = vmatpush1.msra.mxu0 0.0
        %430 = vmatprep.subr.mxu0 0.0
        %431 = vmatpush1.msra.mxu0 0.0
        %432 = vmatprep.mubr.f32.mxu0 0.0
        %433 = vmatmul.mubr.f32.gmra.mrb[0].mxu0 %v366
        %v434 = vpop.f32.mrb[0].mxu0
        %v435 = vadd.f32 0.0, %v434
        %v436 = vpop.f32.mrb[0].mxu0
        %437 = vdwg.mxu0
        %v438 = vrcp.pop %v364
        %v439 = vmul.f32 %v364, %v438
        %v440 = vsub.f32 2.0, %v439
        %v441 = vmul.f32 %v438, %v440
        %v442 = vmul.f32 %v435, %v441
        %443 = vst.msk [vmem:[%s273] sm:$0xff] %vm278, %v442
        %s444 = sand.u32 %s125, 1
        %s445 = scalar_lea.sflag [#allocation4], %s444
        %s446 = sand.u32 %s125, 1
        %s447 = smul.addr %s446, 8
        %s448 = scalar_lea.vmem [#allocation8], %s447
        // Predicated region
        $region45: #{tpu_custom_call.1} parent=31 // pred_check
          %p449 = pneg %p135
        $region46: #{tpu_custom_call.1} parent=31 // pred_check_branch
          %451 = sbr.rel (%p449) target = $region48
        $region47: #{tpu_custom_call.1} parent=31 // pred_region
          %s453 = ssub.s32 128, 128
          %454 = vsyncadd %s445, %s453
          %s455 = sadd.s32 %s28, %s27
          %s456 = smul.addr %s455, 128
          %s457 = scalar_lea.hbm %s3, %s456
          %s459 = sshll.u32 %s448, 4
          %s460 = int_to_ptr.vmem [resolvable:$true] %s459
          %462 = dma.vmem_to_hbm [thread:$0]  %s460, 128, %s457, %s445
        $region48: #{tpu_custom_call.1} parent=31 // pred_fallthru
          _
      $region32: #{tpu_custom_call.1} parent=5 // pred_fallthru
        _
      %p463 = scmp.le.s32.totalorder 2, %s18
      // Predicated region
      $region49: #{tpu_custom_call.1} parent=5 // pred_check
        %p464 = pneg %p463
      $region50: #{tpu_custom_call.1} parent=5 // pred_check_branch
        %466 = sbr.rel (%p464) target = $region52
      $region51: #{tpu_custom_call.1} parent=5 // pred_region
        %s467 = ssub.s32 %s18, 2
        // Predicated region
        $region53: #{tpu_custom_call.1} parent=51 // pred_check
          %p468 = pneg %p141
        $region54: #{tpu_custom_call.1} parent=51 // pred_check_branch
          %470 = sbr.rel (%p468) target = $region56
        $region55: #{tpu_custom_call.1} parent=51 // pred_region
          %s471 = sand.u32 %s126, 1
          %s472 = scalar_lea.sflag [#allocation4], %s471
          %s473 = sand.u32 %s126, 1
          %s474 = smul.addr %s473, 8
          %s475 = scalar_lea.vmem [#allocation8], %s474
          %476 = dma.done %s472, 128
        $region56: #{tpu_custom_call.1} parent=51 // pred_fallthru
          _
      $region52: #{tpu_custom_call.1} parent=5 // pred_fallthru
        _
    $region6: #{tpu_custom_call.1} parent=1 // loop_footer
      %s22 = sadd.s32 1, %s18
    $region7: #{tpu_custom_call.1} parent=1 // loop_footer_branch
      %17 = sbr.rel target = $region3
    $region8: #{tpu_custom_call.1} parent=1 // loop_exit
      _
    %477 = vsyncpa [#allocation3], 1
    %s478 = scalar_lea.sflag [#allocation3], 1
    %479 = vsyncpa %s478, 1
    %480 = vsyncpa [#allocation6], 1
    %s481 = scalar_lea.sflag [#allocation6], 1
    %482 = vsyncpa %s481, 1
    %483 = vsyncpa [#allocation4], 1
    %s484 = scalar_lea.sflag [#allocation4], 1
    %485 = vsyncpa %s484, 1

</llo_original>
